<compile_context>
chip_gen: v7x
topology: tpu7x:2x2x1
jax: 0.10.0
libtpu: 0.0.40
codegen_flags: <defaults>
</compile_context>

<pallas_src>
import jax
import jax.numpy as jnp
from jax import lax
from jax.experimental import pallas as pl
from jax.experimental.pallas import tpu as pltpu


# ------------------------------- kernel ---------------------------------
def stop_conv_kernel(x_ref, w_ref, b_ref, o_ref):
    """x_ref: (Bt, Cin, T_HW), w_ref: (Cout, Cin), b_ref: (Cout, 1),
    o_ref: (Bt, Cout, T_HW)."""
    x = x_ref[...]                                    # native dtype (no upcast)
    w = w_ref[...]

    # Batched 1x1 conv == batched matmul with channels on the contraction dim.
    y = jnp.einsum("oc,bcl->bol", w, x,
                   preferred_element_type=jnp.float32)   # (Bt, Cout, T_HW) f32
    y = y + b_ref[...]                                # (Cout,1) broadcasts over lanes

    # Sigmoid epilogue (transcendental lands on the EUP slot).
    o_ref[...] = jax.nn.sigmoid(y).astype(o_ref.dtype)


# --------------------------- tile selection ------------------------------
def _pick_lane_tile(HW):
    """Largest lane tile (multiple of 128, >=512 preferred) dividing HW."""
    for t in (2048, 1024, 512, 256, 128):
        if t <= HW and HW % t == 0:
            return t
    return HW  # full extent is always a legal block


def _pick_batch_tile(N, Cin, Cout, T_HW, itemsize,
                     budget_bytes=16 * 1024 * 1024):
    """Largest batch block (dividing N) keeping double-buffered VMEM small.

    Per-step VMEM ~= 2 bufs x Bt x (Cin + Cout) x T_HW x itemsize, which must
    stay well under v7x's 64 MiB physical / 32 MiB default scoped limit.
    """
    per_image = 2 * (Cin + Cout) * T_HW * itemsize
    for cand in range(min(N, 8), 0, -1):
        if N % cand == 0 and cand * per_image <= budget_bytes:
            return cand
    return 1


# ------------------------------- wrapper ---------------------------------
@jax.jit
def stop_conv_forward(x_nchw, w_oihw, bias):
    """x_nchw: (N, Cin, H, W); w_oihw: (Cout, Cin, 1, 1); bias: (Cout,)."""
    N, Cin, H, W = x_nchw.shape
    Cout = w_oihw.shape[0]
    HW = H * W

    x2d = x_nchw.reshape(N, Cin, HW)                 # pure reshape, no transpose
    w2d = w_oihw.reshape(Cout, Cin)                  # 1x1 kernel -> 2-D slab
    b2d = bias.reshape(Cout, 1).astype(jnp.float32)  # tiny; added to f32 acc

    T_HW = _pick_lane_tile(HW)
    Bt = _pick_batch_tile(N, Cin, Cout, T_HW, x_nchw.dtype.itemsize)
    grid = (N // Bt, HW // T_HW)

    out = pl.pallas_call(
        stop_conv_kernel,
        out_shape=jax.ShapeDtypeStruct((N, Cout, HW), x_nchw.dtype),
        grid_spec=pltpu.PrefetchScalarGridSpec(
            num_scalar_prefetch=0,
            grid=grid,
            in_specs=[
                pl.BlockSpec((Bt, Cin, T_HW), lambda n, t: (n, 0, t)),
                pl.BlockSpec((Cout, Cin), lambda n, t: (0, 0)),
                pl.BlockSpec((Cout, 1), lambda n, t: (0, 0)),
            ],
            # Lane-dense output: last dim is the spatial tile (multiple of 128).
            out_specs=pl.BlockSpec((Bt, Cout, T_HW), lambda n, t: (n, 0, t)),
        ),
        compiler_params=pltpu.CompilerParams(
            dimension_semantics=("parallel", "parallel")),
    )(x2d, w2d, b2d)

    return out.reshape(N, Cout, H, W)                # pure reshape back to NCHW


# ---------------------------- reference (pure JAX) ----------------------------
def ref_forward(x, w_oihw, bias):
    y = lax.conv_general_dilated(
        x, w_oihw, window_strides=(1, 1), padding="VALID",
        dimension_numbers=("NCHW", "OIHW", "NCHW"))
    y = y + bias[None, :, None, None]
    return jax.nn.sigmoid(y)


if __name__ == "__main__":
    key = jax.random.PRNGKey(0)
    N, Cin, Cout, H, W = 2, 4, 8, 16, 16

    kx, kw, kb = jax.random.split(key, 3)
    x = jax.random.normal(kx, (N, Cin, H, W), jnp.float32)

    # PyTorch Conv2d(kernel_size=1) weight layout: (Cout, Cin, 1, 1)
    w_oihw = jax.random.normal(kw, (Cout, Cin, 1, 1), jnp.float32) * 0.3
    bias = jax.random.normal(kb, (Cout,), jnp.float32) * 0.1

    out = stop_conv_forward(x, w_oihw, bias)
    out = jax.block_until_ready(out)

    ref = jax.block_until_ready(ref_forward(x, w_oihw, bias))
    assert out.shape == (N, Cout, H, W), out.shape
    assert jnp.allclose(out, ref, atol=1e-5, rtol=1e-5), (
        float(jnp.max(jnp.abs(out - ref))))

    print("KERNEL_OK")
</pallas_src>

<mosaic_0001>
module attributes {stable_mosaic.version = 11 : i64} {
  func.func @stop_conv_kernel(%arg0: i32, %arg1: i32, %arg2: memref<2x4x256xf32, #tpu.memory_space<vmem>>, %arg3: memref<8x4xf32, #tpu.memory_space<vmem>>, %arg4: memref<8x1xf32, #tpu.memory_space<vmem>>, %arg5: memref<2x8x256xf32, #tpu.memory_space<vmem>>) attributes {dimension_semantics = [#tpu.dimension_semantics<parallel>, #tpu.dimension_semantics<parallel>], iteration_bounds = array<i64: 1, 1>, scalar_prefetch = 0 : i64, scratch_operands = 0 : i64, tpu.core_type = #tpu.core_type<tc>, window_params = [{transform_indices = @transform_0, window_bounds = array<i64: 2, 4, 256>}, {pipeline_mode = #tpu.pipeline_mode<synchronous>, transform_indices = @transform_1, window_bounds = array<i64: 8, 4>}, {pipeline_mode = #tpu.pipeline_mode<synchronous>, transform_indices = @transform_2, window_bounds = array<i64: 8, 1>}, {transform_indices = @transform_3, window_bounds = array<i64: 2, 8, 256>}]} {
    %c0 = arith.constant 0 : index
    %c0_0 = arith.constant 0 : index
    %c0_1 = arith.constant 0 : index
    %0 = vector.load %arg2[%c0, %c0_0, %c0_1] : memref<2x4x256xf32, #tpu.memory_space<vmem>>, vector<2x4x256xf32>
    %c0_2 = arith.constant 0 : index
    %c0_3 = arith.constant 0 : index
    %1 = vector.load %arg3[%c0_2, %c0_3] : memref<8x4xf32, #tpu.memory_space<vmem>>, vector<8x4xf32>
    "tpu.trace_start"() <{level = 10 : i32, message = "oc,bcl->bol"}> : () -> ()
    %cst = arith.constant dense<0.000000e+00> : vector<2x256x8xf32>
    %2 = tpu.matmul %0, %1, %cst {dimension_numbers = #tpu.dot_dimension_numbers<[1], [1], [0, 2], [0], [0, 0, 0, 2, 1, 0], [], []>} : vector<2x4x256xf32>, vector<8x4xf32>, vector<2x256x8xf32> -> vector<2x256x8xf32>
    %3 = tpu.transpose %2, [0, 2, 1] : vector<2x256x8xf32> -> vector<2x8x256xf32>
    "tpu.trace_stop"() : () -> ()
    %c0_4 = arith.constant 0 : index
    %c0_5 = arith.constant 0 : index
    %4 = vector.load %arg4[%c0_4, %c0_5] : memref<8x1xf32, #tpu.memory_space<vmem>>, vector<8x1xf32>
    %5 = vector.shape_cast %4 : vector<8x1xf32> to vector<1x8x1xf32>
    %6 = vector.broadcast %5 : vector<1x8x1xf32> to vector<2x8x256xf32>
    %7 = arith.addf %3, %6 : vector<2x8x256xf32>
    %8 = arith.negf %7 : vector<2x8x256xf32>
    %9 = math.exp %8 : vector<2x8x256xf32>
    %cst_6 = arith.constant 1.000000e+00 : f32
    %10 = vector.broadcast %cst_6 : f32 to vector<2x8x256xf32>
    %11 = arith.addf %10, %9 : vector<2x8x256xf32>
    %12 = arith.divf %10, %11 : vector<2x8x256xf32>
    %c0_7 = arith.constant 0 : index
    %c0_8 = arith.constant 0 : index
    %c0_9 = arith.constant 0 : index
    %13 = vector.load %arg5[%c0_7, %c0_8, %c0_9] : memref<2x8x256xf32, #tpu.memory_space<vmem>>, vector<2x8x256xf32>
    tpu.vector_store %arg5[%c0_7, %c0_8, %c0_9], %12 {strides = array<i32>} : memref<2x8x256xf32, #tpu.memory_space<vmem>>, vector<2x8x256xf32>,
    return
  }
  func.func @transform_0(%arg0: i32, %arg1: i32) -> (i32, i32, i32) {
    %c0_i32 = arith.constant 0 : i32
    %c0_i32_0 = arith.constant 0 : i32
    return %arg0, %c0_i32, %arg1 : i32, i32, i32
  }
  func.func @transform_1(%arg0: i32, %arg1: i32) -> (i32, i32) {
    %c0_i32 = arith.constant 0 : i32
    %c0_i32_0 = arith.constant 0 : i32
    %c0_i32_1 = arith.constant 0 : i32
    return %c0_i32, %c0_i32_0 : i32, i32
  }
  func.func @transform_2(%arg0: i32, %arg1: i32) -> (i32, i32) {
    %c0_i32 = arith.constant 0 : i32
    %c0_i32_0 = arith.constant 0 : i32
    %c0_i32_1 = arith.constant 0 : i32
    return %c0_i32, %c0_i32_0 : i32, i32
  }
  func.func @transform_3(%arg0: i32, %arg1: i32) -> (i32, i32, i32) {
    %c0_i32 = arith.constant 0 : i32
    %c0_i32_0 = arith.constant 0 : i32
    return %arg0, %c0_i32, %arg1 : i32, i32, i32
  }
}

</mosaic_0001>

<llo_original>
// kernel: stop_conv_forward.1
$region0: #{stop_conv_forward.1}
  #allocation0 [shape = 'u32[]', space=smem, size = 0x4, offset = 0x4, fixed_abs, tag = 'smem constant byte address 0x4 - core index']
  #allocation1 [shape = 'u32[144,128]{1,0:T(1,128)}', space=vmem, size = 0x12000, scoped, tag = 'internal scratch']
  %s0 = inlined_call_operand.vmem [shape: f32[2,4,256], index: 0, kind: input, shape index: {}]
  %s1 = inlined_call_operand.vmem [shape: f32[8,4], index: 1, kind: input, shape index: {}]
  %s2 = inlined_call_operand.vmem [shape: f32[8,1], index: 2, kind: input, shape index: {}]
  %s3 = inlined_call_operand.vmem [shape: f32[2,8,256], index: 3, kind: output, shape index: {}]
  %s4 = sld [smem:[#allocation0]]
  $region22: #{stop_conv_forward.1} parent=0
    _
  %s6 = ssub.s32 1, %s4
  %s7 = scalar_select 0, %s6, %s4
  // Predicated region
  $region2: #{stop_conv_forward.1} parent=0 // pred_check
    _
  $region3: #{stop_conv_forward.1} parent=0 // pred_check_branch
    %9 = sbr.rel (0) target = $region5
  $region4: #{stop_conv_forward.1} parent=0 // pred_region
    _
  $region5: #{stop_conv_forward.1} parent=0 // pred_fallthru
    _
  // Predicated region
  $region6: #{stop_conv_forward.1} parent=0 // pred_check
    _
  $region7: #{stop_conv_forward.1} parent=0 // pred_check_branch
    %11 = sbr.rel (0) target = $region9
  $region8: #{stop_conv_forward.1} parent=0 // pred_region
    _
  $region9: #{stop_conv_forward.1} parent=0 // pred_fallthru
    _
  // Predicated region
  $region10: #{stop_conv_forward.1} parent=0 // pred_check
    _
  $region11: #{stop_conv_forward.1} parent=0 // pred_check_branch
    %13 = sbr.rel (0) target = $region13
  $region12: #{stop_conv_forward.1} parent=0 // pred_region
    _
  $region13: #{stop_conv_forward.1} parent=0 // pred_fallthru
    _
  %v14 = vld [vmem:[%s0] sm:$0xff]
  %v15 = vld [vmem:[%s0 + $0x8] sm:$0xff]
  %v16 = vld [vmem:[%s1] sm:$0xff]
  %v19 = vcombine.high %v14, %v14
  %v20 = vcombine.high %v15, %v15
  %23 = vxpose.xlu0.b32.start [1/16] %v14, 128
  %24 = vxpose.xlu0.b32.cont [2/16] 0.0, 128
  %25 = vxpose.xlu0.b32.cont [3/16] 0.0, 128
  %26 = vxpose.xlu0.b32.cont [4/16] 0.0, 128
  %27 = vxpose.xlu0.b32.cont [5/16] 0.0, 128
  %28 = vxpose.xlu0.b32.cont [6/16] 0.0, 128
  %29 = vxpose.xlu0.b32.cont [7/16] 0.0, 128
  %30 = vxpose.xlu0.b32.cont [8/16] 0.0, 128
  %31 = vxpose.xlu0.b32.cont [9/16] 0.0, 128
  %32 = vxpose.xlu0.b32.cont [10/16] 0.0, 128
  %33 = vxpose.xlu0.b32.cont [11/16] 0.0, 128
  %34 = vxpose.xlu0.b32.cont [12/16] 0.0, 128
  %35 = vxpose.xlu0.b32.cont [13/16] 0.0, 128
  %36 = vxpose.xlu0.b32.cont [14/16] 0.0, 128
  %37 = vxpose.xlu0.b32.cont [15/16] 0.0, 128
  %38 = vxpose.xlu0.b32.end [16/16] 0.0, 128
  %v39 = vpop.trf.xlu0
  %v40 = vpop.trf.xlu0
  %v41 = vpop.trf.xlu0
  %v42 = vpop.trf.xlu0
  %v43 = vpop.trf.xlu0
  %v44 = vpop.trf.xlu0
  %v45 = vpop.trf.xlu0
  %v46 = vpop.trf.xlu0
  %v47 = vpop.trf.xlu0
  %v48 = vpop.trf.xlu0
  %v49 = vpop.trf.xlu0
  %v50 = vpop.trf.xlu0
  %v51 = vpop.trf.xlu0
  %v52 = vpop.trf.xlu0
  %v53 = vpop.trf.xlu0
  %v54 = vpop.trf.xlu0
  %55 = vxpose.xlu0.b32.start [1/16] %v19, 128
  %56 = vxpose.xlu0.b32.cont [2/16] 0.0, 128
  %57 = vxpose.xlu0.b32.cont [3/16] 0.0, 128
  %58 = vxpose.xlu0.b32.cont [4/16] 0.0, 128
  %59 = vxpose.xlu0.b32.cont [5/16] 0.0, 128
  %60 = vxpose.xlu0.b32.cont [6/16] 0.0, 128
  %61 = vxpose.xlu0.b32.cont [7/16] 0.0, 128
  %62 = vxpose.xlu0.b32.cont [8/16] 0.0, 128
  %63 = vxpose.xlu0.b32.cont [9/16] 0.0, 128
  %64 = vxpose.xlu0.b32.cont [10/16] 0.0, 128
  %65 = vxpose.xlu0.b32.cont [11/16] 0.0, 128
  %66 = vxpose.xlu0.b32.cont [12/16] 0.0, 128
  %67 = vxpose.xlu0.b32.cont [13/16] 0.0, 128
  %68 = vxpose.xlu0.b32.cont [14/16] 0.0, 128
  %69 = vxpose.xlu0.b32.cont [15/16] 0.0, 128
  %70 = vxpose.xlu0.b32.end [16/16] 0.0, 128
  %v71 = vpop.trf.xlu0
  %v72 = vpop.trf.xlu0
  %v73 = vpop.trf.xlu0
  %v74 = vpop.trf.xlu0
  %v75 = vpop.trf.xlu0
  %v76 = vpop.trf.xlu0
  %v77 = vpop.trf.xlu0
  %v78 = vpop.trf.xlu0
  %v79 = vpop.trf.xlu0
  %v80 = vpop.trf.xlu0
  %v81 = vpop.trf.xlu0
  %v82 = vpop.trf.xlu0
  %v83 = vpop.trf.xlu0
  %v84 = vpop.trf.xlu0
  %v85 = vpop.trf.xlu0
  %v86 = vpop.trf.xlu0
  %87 = vxpose.xlu0.b32.start [1/16] %v15, 128
  %88 = vxpose.xlu0.b32.cont [2/16] 0.0, 128
  %89 = vxpose.xlu0.b32.cont [3/16] 0.0, 128
  %90 = vxpose.xlu0.b32.cont [4/16] 0.0, 128
  %91 = vxpose.xlu0.b32.cont [5/16] 0.0, 128
  %92 = vxpose.xlu0.b32.cont [6/16] 0.0, 128
  %93 = vxpose.xlu0.b32.cont [7/16] 0.0, 128
  %94 = vxpose.xlu0.b32.cont [8/16] 0.0, 128
  %95 = vxpose.xlu0.b32.cont [9/16] 0.0, 128
  %96 = vxpose.xlu0.b32.cont [10/16] 0.0, 128
  %97 = vxpose.xlu0.b32.cont [11/16] 0.0, 128
  %98 = vxpose.xlu0.b32.cont [12/16] 0.0, 128
  %99 = vxpose.xlu0.b32.cont [13/16] 0.0, 128
  %100 = vxpose.xlu0.b32.cont [14/16] 0.0, 128
  %101 = vxpose.xlu0.b32.cont [15/16] 0.0, 128
  %102 = vxpose.xlu0.b32.end [16/16] 0.0, 128
  %v103 = vpop.trf.xlu0
  %v104 = vpop.trf.xlu0
  %v105 = vpop.trf.xlu0
  %v106 = vpop.trf.xlu0
  %v107 = vpop.trf.xlu0
  %v108 = vpop.trf.xlu0
  %v109 = vpop.trf.xlu0
  %v110 = vpop.trf.xlu0
  %v111 = vpop.trf.xlu0
  %v112 = vpop.trf.xlu0
  %v113 = vpop.trf.xlu0
  %v114 = vpop.trf.xlu0
  %v115 = vpop.trf.xlu0
  %v116 = vpop.trf.xlu0
  %v117 = vpop.trf.xlu0
  %v118 = vpop.trf.xlu0
  %119 = vxpose.xlu0.b32.start [1/16] %v20, 128
  %120 = vxpose.xlu0.b32.cont [2/16] 0.0, 128
  %121 = vxpose.xlu0.b32.cont [3/16] 0.0, 128
  %122 = vxpose.xlu0.b32.cont [4/16] 0.0, 128
  %123 = vxpose.xlu0.b32.cont [5/16] 0.0, 128
  %124 = vxpose.xlu0.b32.cont [6/16] 0.0, 128
  %125 = vxpose.xlu0.b32.cont [7/16] 0.0, 128
  %126 = vxpose.xlu0.b32.cont [8/16] 0.0, 128
  %127 = vxpose.xlu0.b32.cont [9/16] 0.0, 128
  %128 = vxpose.xlu0.b32.cont [10/16] 0.0, 128
  %129 = vxpose.xlu0.b32.cont [11/16] 0.0, 128
  %130 = vxpose.xlu0.b32.cont [12/16] 0.0, 128
  %131 = vxpose.xlu0.b32.cont [13/16] 0.0, 128
  %132 = vxpose.xlu0.b32.cont [14/16] 0.0, 128
  %133 = vxpose.xlu0.b32.cont [15/16] 0.0, 128
  %134 = vxpose.xlu0.b32.end [16/16] 0.0, 128
  %v135 = vpop.trf.xlu0
  %v136 = vpop.trf.xlu0
  %v137 = vpop.trf.xlu0
  %v138 = vpop.trf.xlu0
  %v139 = vpop.trf.xlu0
  %v140 = vpop.trf.xlu0
  %v141 = vpop.trf.xlu0
  %v142 = vpop.trf.xlu0
  %v143 = vpop.trf.xlu0
  %v144 = vpop.trf.xlu0
  %v145 = vpop.trf.xlu0
  %v146 = vpop.trf.xlu0
  %v147 = vpop.trf.xlu0
  %v148 = vpop.trf.xlu0
  %v149 = vpop.trf.xlu0
  %v150 = vpop.trf.xlu0
  %vm151 = vcmask 31744
  %v153 = vsel %vm151, %v39, 0
  %v156 = vsel %vm151, %v40, 0
  %v159 = vsel %vm151, %v41, 0
  %v162 = vsel %vm151, %v42, 0
  %v165 = vsel %vm151, %v43, 0
  %v168 = vsel %vm151, %v44, 0
  %v171 = vsel %vm151, %v45, 0
  %v174 = vsel %vm151, %v46, 0
  %v177 = vsel %vm151, %v47, 0
  %v180 = vsel %vm151, %v48, 0
  %v183 = vsel %vm151, %v49, 0
  %v186 = vsel %vm151, %v50, 0
  %v189 = vsel %vm151, %v51, 0
  %v192 = vsel %vm151, %v52, 0
  %v195 = vsel %vm151, %v53, 0
  %v198 = vsel %vm151, %v54, 0
  %v201 = vsel %vm151, %v71, 0
  %v204 = vsel %vm151, %v72, 0
  %v207 = vsel %vm151, %v73, 0
  %v210 = vsel %vm151, %v74, 0
  %v213 = vsel %vm151, %v75, 0
  %v216 = vsel %vm151, %v76, 0
  %v219 = vsel %vm151, %v77, 0
  %v222 = vsel %vm151, %v78, 0
  %v225 = vsel %vm151, %v79, 0
  %v228 = vsel %vm151, %v80, 0
  %v231 = vsel %vm151, %v81, 0
  %v234 = vsel %vm151, %v82, 0
  %v237 = vsel %vm151, %v83, 0
  %v240 = vsel %vm151, %v84, 0
  %v243 = vsel %vm151, %v85, 0
  %v246 = vsel %vm151, %v86, 0
  %v249 = vsel %vm151, %v103, 0
  %v252 = vsel %vm151, %v104, 0
  %v255 = vsel %vm151, %v105, 0
  %v258 = vsel %vm151, %v106, 0
  %v261 = vsel %vm151, %v107, 0
  %v264 = vsel %vm151, %v108, 0
  %v267 = vsel %vm151, %v109, 0
  %v270 = vsel %vm151, %v110, 0
  %v273 = vsel %vm151, %v111, 0
  %v276 = vsel %vm151, %v112, 0
  %v279 = vsel %vm151, %v113, 0
  %v282 = vsel %vm151, %v114, 0
  %v285 = vsel %vm151, %v115, 0
  %v288 = vsel %vm151, %v116, 0
  %v291 = vsel %vm151, %v117, 0
  %v294 = vsel %vm151, %v118, 0
  %v297 = vsel %vm151, %v135, 0
  %v300 = vsel %vm151, %v136, 0
  %v303 = vsel %vm151, %v137, 0
  %v306 = vsel %vm151, %v138, 0
  %v309 = vsel %vm151, %v139, 0
  %v312 = vsel %vm151, %v140, 0
  %v315 = vsel %vm151, %v141, 0
  %v318 = vsel %vm151, %v142, 0
  %v321 = vsel %vm151, %v143, 0
  %v324 = vsel %vm151, %v144, 0
  %v327 = vsel %vm151, %v145, 0
  %v330 = vsel %vm151, %v146, 0
  %v333 = vsel %vm151, %v147, 0
  %v336 = vsel %vm151, %v148, 0
  %v339 = vsel %vm151, %v149, 0
  %v342 = vsel %vm151, %v150, 0
  %v345 = vsel %vm151, %v16, 0
  %347 = vmatprep.subr.mxu0 0.0
  %348 = vmatpush1.xpose.msra.mxu0 %v345
  %349 = vmatprep.subr.mxu0 0.0
  %350 = vmatpush1.xpose.msra.mxu0 0.0
  %351 = vmatprep.subr.mxu0 0.0
  %352 = vmatpush1.xpose.msra.mxu0 0.0
  %353 = vmatprep.subr.mxu0 0.0
  %354 = vmatpush1.xpose.msra.mxu0 0.0
  %355 = vmatprep.subr.mxu0 0.0
  %356 = vmatpush1.xpose.msra.mxu0 0.0
  %357 = vmatprep.subr.mxu0 0.0
  %358 = vmatpush1.xpose.msra.mxu0 0.0
  %359 = vmatprep.subr.mxu0 0.0
  %360 = vmatpush1.xpose.msra.mxu0 0.0
  %361 = vmatprep.subr.mxu0 0.0
  %362 = vmatpush1.xpose.msra.mxu0 0.0
  %363 = vmatprep.subr.mxu0 0.0
  %364 = vmatpush1.xpose.msra.mxu0 0.0
  %365 = vmatprep.subr.mxu0 0.0
  %366 = vmatpush1.xpose.msra.mxu0 0.0
  %367 = vmatprep.subr.mxu0 0.0
  %368 = vmatpush1.xpose.msra.mxu0 0.0
  %369 = vmatprep.subr.mxu0 0.0
  %370 = vmatpush1.xpose.msra.mxu0 0.0
  %371 = vmatprep.subr.mxu0 0.0
  %372 = vmatpush1.xpose.msra.mxu0 0.0
  %373 = vmatprep.subr.mxu0 0.0
  %374 = vmatpush1.xpose.msra.mxu0 0.0
  %375 = vmatprep.subr.mxu0 0.0
  %376 = vmatpush1.xpose.msra.mxu0 0.0
  %377 = vmatprep.subr.mxu0 0.0
  %378 = vmatpush1.xpose.msra.mxu0 0.0
  %379 = vmatprep.subr.mxu0 0.0
  %380 = vmatpush1.xpose.msra.mxu0 0.0
  %381 = vmatprep.subr.mxu0 0.0
  %382 = vmatpush1.xpose.msra.mxu0 0.0
  %383 = vmatprep.subr.mxu0 0.0
  %384 = vmatpush1.xpose.msra.mxu0 0.0
  %385 = vmatprep.subr.mxu0 0.0
  %386 = vmatpush1.xpose.msra.mxu0 0.0
  %387 = vmatprep.subr.mxu0 0.0
  %388 = vmatpush1.xpose.msra.mxu0 0.0
  %389 = vmatprep.subr.mxu0 0.0
  %390 = vmatpush1.xpose.msra.mxu0 0.0
  %391 = vmatprep.subr.mxu0 0.0
  %392 = vmatpush1.xpose.msra.mxu0 0.0
  %393 = vmatprep.subr.mxu0 0.0
  %394 = vmatpush1.xpose.msra.mxu0 0.0
  %395 = vmatprep.subr.mxu0 0.0
  %396 = vmatpush1.xpose.msra.mxu0 0.0
  %397 = vmatprep.subr.mxu0 0.0
  %398 = vmatpush1.xpose.msra.mxu0 0.0
  %399 = vmatprep.subr.mxu0 0.0
  %400 = vmatpush1.xpose.msra.mxu0 0.0
  %401 = vmatprep.subr.mxu0 0.0
  %402 = vmatpush1.xpose.msra.mxu0 0.0
  %403 = vmatprep.subr.mxu0 0.0
  %404 = vmatpush1.xpose.msra.mxu0 0.0
  %405 = vmatprep.subr.mxu0 0.0
  %406 = vmatpush1.xpose.msra.mxu0 0.0
  %407 = vmatprep.subr.mxu0 0.0
  %408 = vmatpush1.xpose.msra.mxu0 0.0
  %409 = vmatprep.subr.mxu0 0.0
  %410 = vmatpush1.xpose.msra.mxu0 0.0
  %411 = vmatprep.mubr.f32.mxu0 0.0
  %412 = vmatmul.mubr.f32.gmra.mrb[0].mxu0 %v153
  %v413 = vpop.f32.mrb[0].mxu0
  %v414 = vadd.f32 0.0, %v413
  %v415 = vpop.f32.mrb[0].mxu0
  %416 = vmatprep.mubr.f32.mxu0 0.0
  %417 = vmatmul.mubr.f32.gmra.mrb[0].mxu0 %v156
  %v418 = vpop.f32.mrb[0].mxu0
  %v419 = vadd.f32 0.0, %v418
  %v420 = vpop.f32.mrb[0].mxu0
  %421 = vmatprep.mubr.f32.mxu0 0.0
  %422 = vmatmul.mubr.f32.gmra.mrb[0].mxu0 %v159
  %v423 = vpop.f32.mrb[0].mxu0
  %v424 = vadd.f32 0.0, %v423
  %v425 = vpop.f32.mrb[0].mxu0
  %426 = vmatprep.mubr.f32.mxu0 0.0
  %427 = vmatmul.mubr.f32.gmra.mrb[0].mxu0 %v162
  %v428 = vpop.f32.mrb[0].mxu0
  %v429 = vadd.f32 0.0, %v428
  %v430 = vpop.f32.mrb[0].mxu0
  %431 = vmatprep.mubr.f32.mxu0 0.0
  %432 = vmatmul.mubr.f32.gmra.mrb[0].mxu0 %v165
  %v433 = vpop.f32.mrb[0].mxu0
  %v434 = vadd.f32 0.0, %v433
  %v435 = vpop.f32.mrb[0].mxu0
  %436 = vmatprep.mubr.f32.mxu0 0.0
  %437 = vmatmul.mubr.f32.gmra.mrb[0].mxu0 %v168
  %v438 = vpop.f32.mrb[0].mxu0
  %v439 = vadd.f32 0.0, %v438
  %v440 = vpop.f32.mrb[0].mxu0
  %441 = vmatprep.mubr.f32.mxu0 0.0
  %442 = vmatmul.mubr.f32.gmra.mrb[0].mxu0 %v171
  %v443 = vpop.f32.mrb[0].mxu0
  %v444 = vadd.f32 0.0, %v443
  %v445 = vpop.f32.mrb[0].mxu0
  %446 = vmatprep.mubr.f32.mxu0 0.0
  %447 = vmatmul.mubr.f32.gmra.mrb[0].mxu0 %v174
  %v448 = vpop.f32.mrb[0].mxu0
  %v449 = vadd.f32 0.0, %v448
  %v450 = vpop.f32.mrb[0].mxu0
  %451 = vmatprep.mubr.f32.mxu0 0.0
  %452 = vmatmul.mubr.f32.gmra.mrb[0].mxu0 %v177
  %v453 = vpop.f32.mrb[0].mxu0
  %v454 = vadd.f32 0.0, %v453
  %v455 = vpop.f32.mrb[0].mxu0
  %456 = vmatprep.mubr.f32.mxu0 0.0
  %457 = vmatmul.mubr.f32.gmra.mrb[0].mxu0 %v180
  %v458 = vpop.f32.mrb[0].mxu0
  %v459 = vadd.f32 0.0, %v458
  %v460 = vpop.f32.mrb[0].mxu0
  %461 = vmatprep.mubr.f32.mxu0 0.0
  %462 = vmatmul.mubr.f32.gmra.mrb[0].mxu0 %v183
  %v463 = vpop.f32.mrb[0].mxu0
  %v464 = vadd.f32 0.0, %v463
  %v465 = vpop.f32.mrb[0].mxu0
  %466 = vmatprep.mubr.f32.mxu0 0.0
  %467 = vmatmul.mubr.f32.gmra.mrb[0].mxu0 %v186
  %v468 = vpop.f32.mrb[0].mxu0
  %v469 = vadd.f32 0.0, %v468
  %v470 = vpop.f32.mrb[0].mxu0
  %471 = vmatprep.mubr.f32.mxu0 0.0
  %472 = vmatmul.mubr.f32.gmra.mrb[0].mxu0 %v189
  %v473 = vpop.f32.mrb[0].mxu0
  %v474 = vadd.f32 0.0, %v473
  %v475 = vpop.f32.mrb[0].mxu0
  %476 = vmatprep.mubr.f32.mxu0 0.0
  %477 = vmatmul.mubr.f32.gmra.mrb[0].mxu0 %v192
  %v478 = vpop.f32.mrb[0].mxu0
  %v479 = vadd.f32 0.0, %v478
  %v480 = vpop.f32.mrb[0].mxu0
  %481 = vmatprep.mubr.f32.mxu0 0.0
  %482 = vmatmul.mubr.f32.gmra.mrb[0].mxu0 %v195
  %v483 = vpop.f32.mrb[0].mxu0
  %v484 = vadd.f32 0.0, %v483
  %v485 = vpop.f32.mrb[0].mxu0
  %486 = vmatprep.mubr.f32.mxu0 0.0
  %487 = vmatmul.mubr.f32.gmra.mrb[0].mxu0 %v198
  %v488 = vpop.f32.mrb[0].mxu0
  %v489 = vadd.f32 0.0, %v488
  %v490 = vpop.f32.mrb[0].mxu0
  %491 = vmatprep.mubr.f32.mxu0 0.0
  %492 = vmatmul.mubr.f32.gmra.mrb[0].mxu0 %v201
  %v493 = vpop.f32.mrb[0].mxu0
  %v494 = vadd.f32 0.0, %v493
  %v495 = vpop.f32.mrb[0].mxu0
  %496 = vmatprep.mubr.f32.mxu0 0.0
  %497 = vmatmul.mubr.f32.gmra.mrb[0].mxu0 %v204
  %v498 = vpop.f32.mrb[0].mxu0
  %v499 = vadd.f32 0.0, %v498
  %v500 = vpop.f32.mrb[0].mxu0
  %501 = vmatprep.mubr.f32.mxu0 0.0
  %502 = vmatmul.mubr.f32.gmra.mrb[0].mxu0 %v207
  %v503 = vpop.f32.mrb[0].mxu0
  %v504 = vadd.f32 0.0, %v503
  %v505 = vpop.f32.mrb[0].mxu0
  %506 = vmatprep.mubr.f32.mxu0 0.0
  %507 = vmatmul.mubr.f32.gmra.mrb[0].mxu0 %v210
  %v508 = vpop.f32.mrb[0].mxu0
  %v509 = vadd.f32 0.0, %v508
  %v510 = vpop.f32.mrb[0].mxu0
  %511 = vmatprep.mubr.f32.mxu0 0.0
  %512 = vmatmul.mubr.f32.gmra.mrb[0].mxu0 %v213
  %v513 = vpop.f32.mrb[0].mxu0
  %v514 = vadd.f32 0.0, %v513
  %v515 = vpop.f32.mrb[0].mxu0
  %516 = vmatprep.mubr.f32.mxu0 0.0
  %517 = vmatmul.mubr.f32.gmra.mrb[0].mxu0 %v216
  %v518 = vpop.f32.mrb[0].mxu0
  %v519 = vadd.f32 0.0, %v518
  %v520 = vpop.f32.mrb[0].mxu0
  %521 = vmatprep.mubr.f32.mxu0 0.0
  %522 = vmatmul.mubr.f32.gmra.mrb[0].mxu0 %v219
  %v523 = vpop.f32.mrb[0].mxu0
  %v524 = vadd.f32 0.0, %v523
  %v525 = vpop.f32.mrb[0].mxu0
  %526 = vmatprep.mubr.f32.mxu0 0.0
  %527 = vmatmul.mubr.f32.gmra.mrb[0].mxu0 %v222
  %v528 = vpop.f32.mrb[0].mxu0
  %v529 = vadd.f32 0.0, %v528
  %v530 = vpop.f32.mrb[0].mxu0
  %531 = vmatprep.mubr.f32.mxu0 0.0
  %532 = vmatmul.mubr.f32.gmra.mrb[0].mxu0 %v225
  %v533 = vpop.f32.mrb[0].mxu0
  %v534 = vadd.f32 0.0, %v533
  %v535 = vpop.f32.mrb[0].mxu0
  %536 = vmatprep.mubr.f32.mxu0 0.0
  %537 = vmatmul.mubr.f32.gmra.mrb[0].mxu0 %v228
  %v538 = vpop.f32.mrb[0].mxu0
  %v539 = vadd.f32 0.0, %v538
  %v540 = vpop.f32.mrb[0].mxu0
  %541 = vmatprep.mubr.f32.mxu0 0.0
  %542 = vmatmul.mubr.f32.gmra.mrb[0].mxu0 %v231
  %v543 = vpop.f32.mrb[0].mxu0
  %v544 = vadd.f32 0.0, %v543
  %v545 = vpop.f32.mrb[0].mxu0
  %546 = vmatprep.mubr.f32.mxu0 0.0
  %547 = vmatmul.mubr.f32.gmra.mrb[0].mxu0 %v234
  %v548 = vpop.f32.mrb[0].mxu0
  %v549 = vadd.f32 0.0, %v548
  %v550 = vpop.f32.mrb[0].mxu0
  %551 = vmatprep.mubr.f32.mxu0 0.0
  %552 = vmatmul.mubr.f32.gmra.mrb[0].mxu0 %v237
  %v553 = vpop.f32.mrb[0].mxu0
  %v554 = vadd.f32 0.0, %v553
  %v555 = vpop.f32.mrb[0].mxu0
  %556 = vmatprep.mubr.f32.mxu0 0.0
  %557 = vmatmul.mubr.f32.gmra.mrb[0].mxu0 %v240
  %v558 = vpop.f32.mrb[0].mxu0
  %v559 = vadd.f32 0.0, %v558
  %v560 = vpop.f32.mrb[0].mxu0
  %561 = vmatprep.mubr.f32.mxu0 0.0
  %562 = vmatmul.mubr.f32.gmra.mrb[0].mxu0 %v243
  %v563 = vpop.f32.mrb[0].mxu0
  %v564 = vadd.f32 0.0, %v563
  %v565 = vpop.f32.mrb[0].mxu0
  %566 = vmatprep.mubr.f32.mxu0 0.0
  %567 = vmatmul.mubr.f32.gmra.mrb[0].mxu0 %v246
  %v568 = vpop.f32.mrb[0].mxu0
  %v569 = vadd.f32 0.0, %v568
  %v570 = vpop.f32.mrb[0].mxu0
  %571 = vmatprep.mubr.f32.mxu0 0.0
  %572 = vmatmul.mubr.f32.gmra.mrb[0].mxu0 %v249
  %v573 = vpop.f32.mrb[0].mxu0
  %v574 = vadd.f32 0.0, %v573
  %v575 = vpop.f32.mrb[0].mxu0
  %576 = vmatprep.mubr.f32.mxu0 0.0
  %577 = vmatmul.mubr.f32.gmra.mrb[0].mxu0 %v252
  %v578 = vpop.f32.mrb[0].mxu0
  %v579 = vadd.f32 0.0, %v578
  %v580 = vpop.f32.mrb[0].mxu0
  %581 = vmatprep.mubr.f32.mxu0 0.0
  %582 = vmatmul.mubr.f32.gmra.mrb[0].mxu0 %v255
  %v583 = vpop.f32.mrb[0].mxu0
  %v584 = vadd.f32 0.0, %v583
  %v585 = vpop.f32.mrb[0].mxu0
  %586 = vmatprep.mubr.f32.mxu0 0.0
  %587 = vmatmul.mubr.f32.gmra.mrb[0].mxu0 %v258
  %v588 = vpop.f32.mrb[0].mxu0
  %v589 = vadd.f32 0.0, %v588
  %v590 = vpop.f32.mrb[0].mxu0
  %591 = vmatprep.mubr.f32.mxu0 0.0
  %592 = vmatmul.mubr.f32.gmra.mrb[0].mxu0 %v261
  %v593 = vpop.f32.mrb[0].mxu0
  %v594 = vadd.f32 0.0, %v593
  %v595 = vpop.f32.mrb[0].mxu0
  %596 = vmatprep.mubr.f32.mxu0 0.0
  %597 = vmatmul.mubr.f32.gmra.mrb[0].mxu0 %v264
  %v598 = vpop.f32.mrb[0].mxu0
  %v599 = vadd.f32 0.0, %v598
  %v600 = vpop.f32.mrb[0].mxu0
  %601 = vmatprep.mubr.f32.mxu0 0.0
  %602 = vmatmul.mubr.f32.gmra.mrb[0].mxu0 %v267
  %v603 = vpop.f32.mrb[0].mxu0
  %v604 = vadd.f32 0.0, %v603
  %v605 = vpop.f32.mrb[0].mxu0
  %606 = vmatprep.mubr.f32.mxu0 0.0
  %607 = vmatmul.mubr.f32.gmra.mrb[0].mxu0 %v270
  %v608 = vpop.f32.mrb[0].mxu0
  %v609 = vadd.f32 0.0, %v608
  %v610 = vpop.f32.mrb[0].mxu0
  %611 = vmatprep.mubr.f32.mxu0 0.0
  %612 = vmatmul.mubr.f32.gmra.mrb[0].mxu0 %v273
  %v613 = vpop.f32.mrb[0].mxu0
  %v614 = vadd.f32 0.0, %v613
  %v615 = vpop.f32.mrb[0].mxu0
  %616 = vmatprep.mubr.f32.mxu0 0.0
  %617 = vmatmul.mubr.f32.gmra.mrb[0].mxu0 %v276
  %v618 = vpop.f32.mrb[0].mxu0
  %v619 = vadd.f32 0.0, %v618
  %v620 = vpop.f32.mrb[0].mxu0
  %621 = vmatprep.mubr.f32.mxu0 0.0
  %622 = vmatmul.mubr.f32.gmra.mrb[0].mxu0 %v279
  %v623 = vpop.f32.mrb[0].mxu0
  %v624 = vadd.f32 0.0, %v623
  %v625 = vpop.f32.mrb[0].mxu0
  %626 = vmatprep.mubr.f32.mxu0 0.0
  %627 = vmatmul.mubr.f32.gmra.mrb[0].mxu0 %v282
  %v628 = vpop.f32.mrb[0].mxu0
  %v629 = vadd.f32 0.0, %v628
  %v630 = vpop.f32.mrb[0].mxu0
  %631 = vmatprep.mubr.f32.mxu0 0.0
  %632 = vmatmul.mubr.f32.gmra.mrb[0].mxu0 %v285
  %v633 = vpop.f32.mrb[0].mxu0
  %v634 = vadd.f32 0.0, %v633
  %v635 = vpop.f32.mrb[0].mxu0
  %636 = vmatprep.mubr.f32.mxu0 0.0
  %637 = vmatmul.mubr.f32.gmra.mrb[0].mxu0 %v288
  %v638 = vpop.f32.mrb[0].mxu0
  %v639 = vadd.f32 0.0, %v638
  %v640 = vpop.f32.mrb[0].mxu0
  %641 = vmatprep.mubr.f32.mxu0 0.0
  %642 = vmatmul.mubr.f32.gmra.mrb[0].mxu0 %v291
  %v643 = vpop.f32.mrb[0].mxu0
  %v644 = vadd.f32 0.0, %v643
  %v645 = vpop.f32.mrb[0].mxu0
  %646 = vmatprep.mubr.f32.mxu0 0.0
  %647 = vmatmul.mubr.f32.gmra.mrb[0].mxu0 %v294
  %v648 = vpop.f32.mrb[0].mxu0
  %v649 = vadd.f32 0.0, %v648
  %v650 = vpop.f32.mrb[0].mxu0
  %651 = vmatprep.mubr.f32.mxu0 0.0
  %652 = vmatmul.mubr.f32.gmra.mrb[0].mxu0 %v297
  %v653 = vpop.f32.mrb[0].mxu0
  %v654 = vadd.f32 0.0, %v653
  %v655 = vpop.f32.mrb[0].mxu0
  %656 = vmatprep.mubr.f32.mxu0 0.0
  %657 = vmatmul.mubr.f32.gmra.mrb[0].mxu0 %v300
  %v658 = vpop.f32.mrb[0].mxu0
  %v659 = vadd.f32 0.0, %v658
  %v660 = vpop.f32.mrb[0].mxu0
  %661 = vmatprep.mubr.f32.mxu0 0.0
  %662 = vmatmul.mubr.f32.gmra.mrb[0].mxu0 %v303
  %v663 = vpop.f32.mrb[0].mxu0
  %v664 = vadd.f32 0.0, %v663
  %v665 = vpop.f32.mrb[0].mxu0
  %666 = vmatprep.mubr.f32.mxu0 0.0
  %667 = vmatmul.mubr.f32.gmra.mrb[0].mxu0 %v306
  %v668 = vpop.f32.mrb[0].mxu0
  %v669 = vadd.f32 0.0, %v668
  %v670 = vpop.f32.mrb[0].mxu0
  %671 = vmatprep.mubr.f32.mxu0 0.0
  %672 = vmatmul.mubr.f32.gmra.mrb[0].mxu0 %v309
  %v673 = vpop.f32.mrb[0].mxu0
  %v674 = vadd.f32 0.0, %v673
  %v675 = vpop.f32.mrb[0].mxu0
  %676 = vmatprep.mubr.f32.mxu0 0.0
  %677 = vmatmul.mubr.f32.gmra.mrb[0].mxu0 %v312
  %v678 = vpop.f32.mrb[0].mxu0
  %v679 = vadd.f32 0.0, %v678
  %v680 = vpop.f32.mrb[0].mxu0
  %681 = vmatprep.mubr.f32.mxu0 0.0
  %682 = vmatmul.mubr.f32.gmra.mrb[0].mxu0 %v315
  %v683 = vpop.f32.mrb[0].mxu0
  %v684 = vadd.f32 0.0, %v683
  %v685 = vpop.f32.mrb[0].mxu0
  %686 = vmatprep.mubr.f32.mxu0 0.0
  %687 = vmatmul.mubr.f32.gmra.mrb[0].mxu0 %v318
  %v688 = vpop.f32.mrb[0].mxu0
  %v689 = vadd.f32 0.0, %v688
  %v690 = vpop.f32.mrb[0].mxu0
  %691 = vmatprep.mubr.f32.mxu0 0.0
  %692 = vmatmul.mubr.f32.gmra.mrb[0].mxu0 %v321
  %v693 = vpop.f32.mrb[0].mxu0
  %v694 = vadd.f32 0.0, %v693
  %v695 = vpop.f32.mrb[0].mxu0
  %696 = vmatprep.mubr.f32.mxu0 0.0
  %697 = vmatmul.mubr.f32.gmra.mrb[0].mxu0 %v324
  %v698 = vpop.f32.mrb[0].mxu0
  %v699 = vadd.f32 0.0, %v698
  %v700 = vpop.f32.mrb[0].mxu0
  %701 = vmatprep.mubr.f32.mxu0 0.0
  %702 = vmatmul.mubr.f32.gmra.mrb[0].mxu0 %v327
  %v703 = vpop.f32.mrb[0].mxu0
  %v704 = vadd.f32 0.0, %v703
  %v705 = vpop.f32.mrb[0].mxu0
  %706 = vmatprep.mubr.f32.mxu0 0.0
  %707 = vmatmul.mubr.f32.gmra.mrb[0].mxu0 %v330
  %v708 = vpop.f32.mrb[0].mxu0
  %v709 = vadd.f32 0.0, %v708
  %v710 = vpop.f32.mrb[0].mxu0
  %711 = vmatprep.mubr.f32.mxu0 0.0
  %712 = vmatmul.mubr.f32.gmra.mrb[0].mxu0 %v333
  %v713 = vpop.f32.mrb[0].mxu0
  %v714 = vadd.f32 0.0, %v713
  %v715 = vpop.f32.mrb[0].mxu0
  %716 = vmatprep.mubr.f32.mxu0 0.0
  %717 = vmatmul.mubr.f32.gmra.mrb[0].mxu0 %v336
  %v718 = vpop.f32.mrb[0].mxu0
  %v719 = vadd.f32 0.0, %v718
  %v720 = vpop.f32.mrb[0].mxu0
  %721 = vmatprep.mubr.f32.mxu0 0.0
  %722 = vmatmul.mubr.f32.gmra.mrb[0].mxu0 %v339
  %v723 = vpop.f32.mrb[0].mxu0
  %v724 = vadd.f32 0.0, %v723
  %v725 = vpop.f32.mrb[0].mxu0
  %726 = vmatprep.mubr.f32.mxu0 0.0
  %727 = vmatmul.mubr.f32.gmra.mrb[0].mxu0 %v342
  %v728 = vpop.f32.mrb[0].mxu0
  %v729 = vadd.f32 0.0, %v728
  %v730 = vpop.f32.mrb[0].mxu0
  %731 = vdwg.mxu0
  %732 = vxpose.xlu0.b32.start [1/16] %v414, 128
  %733 = vxpose.xlu0.b32.cont [2/16] %v419, 128
  %734 = vxpose.xlu0.b32.cont [3/16] %v424, 128
  %735 = vxpose.xlu0.b32.cont [4/16] %v429, 128
  %736 = vxpose.xlu0.b32.cont [5/16] %v434, 128
  %737 = vxpose.xlu0.b32.cont [6/16] %v439, 128
  %738 = vxpose.xlu0.b32.cont [7/16] %v444, 128
  %739 = vxpose.xlu0.b32.cont [8/16] %v449, 128
  %740 = vxpose.xlu0.b32.cont [9/16] %v454, 128
  %741 = vxpose.xlu0.b32.cont [10/16] %v459, 128
  %742 = vxpose.xlu0.b32.cont [11/16] %v464, 128
  %743 = vxpose.xlu0.b32.cont [12/16] %v469, 128
  %744 = vxpose.xlu0.b32.cont [13/16] %v474, 128
  %745 = vxpose.xlu0.b32.cont [14/16] %v479, 128
  %746 = vxpose.xlu0.b32.cont [15/16] %v484, 128
  %747 = vxpose.xlu0.b32.end [16/16] %v489, 128
  %v748 = vpop.trf.xlu0
  %v749 = vpop.trf.xlu0
  %v750 = vpop.trf.xlu0
  %v751 = vpop.trf.xlu0
  %v752 = vpop.trf.xlu0
  %v753 = vpop.trf.xlu0
  %v754 = vpop.trf.xlu0
  %v755 = vpop.trf.xlu0
  %v756 = vpop.trf.xlu0
  %v757 = vpop.trf.xlu0
  %v758 = vpop.trf.xlu0
  %v759 = vpop.trf.xlu0
  %v760 = vpop.trf.xlu0
  %v761 = vpop.trf.xlu0
  %v762 = vpop.trf.xlu0
  %v763 = vpop.trf.xlu0
  %764 = vxpose.xlu0.b32.start [1/16] %v494, 128
  %765 = vxpose.xlu0.b32.cont [2/16] %v499, 128
  %766 = vxpose.xlu0.b32.cont [3/16] %v504, 128
  %767 = vxpose.xlu0.b32.cont [4/16] %v509, 128
  %768 = vxpose.xlu0.b32.cont [5/16] %v514, 128
  %769 = vxpose.xlu0.b32.cont [6/16] %v519, 128
  %770 = vxpose.xlu0.b32.cont [7/16] %v524, 128
  %771 = vxpose.xlu0.b32.cont [8/16] %v529, 128
  %772 = vxpose.xlu0.b32.cont [9/16] %v534, 128
  %773 = vxpose.xlu0.b32.cont [10/16] %v539, 128
  %774 = vxpose.xlu0.b32.cont [11/16] %v544, 128
  %775 = vxpose.xlu0.b32.cont [12/16] %v549, 128
  %776 = vxpose.xlu0.b32.cont [13/16] %v554, 128
  %777 = vxpose.xlu0.b32.cont [14/16] %v559, 128
  %778 = vxpose.xlu0.b32.cont [15/16] %v564, 128
  %779 = vxpose.xlu0.b32.end [16/16] %v569, 128
  %v780 = vpop.trf.xlu0
  %v781 = vpop.trf.xlu0
  %v782 = vpop.trf.xlu0
  %v783 = vpop.trf.xlu0
  %v784 = vpop.trf.xlu0
  %v785 = vpop.trf.xlu0
  %v786 = vpop.trf.xlu0
  %v787 = vpop.trf.xlu0
  %v788 = vpop.trf.xlu0
  %v789 = vpop.trf.xlu0
  %v790 = vpop.trf.xlu0
  %v791 = vpop.trf.xlu0
  %v792 = vpop.trf.xlu0
  %v793 = vpop.trf.xlu0
  %v794 = vpop.trf.xlu0
  %v795 = vpop.trf.xlu0
  %796 = vxpose.xlu0.b32.start [1/16] %v574, 128
  %797 = vxpose.xlu0.b32.cont [2/16] %v579, 128
  %798 = vxpose.xlu0.b32.cont [3/16] %v584, 128
  %799 = vxpose.xlu0.b32.cont [4/16] %v589, 128
  %800 = vxpose.xlu0.b32.cont [5/16] %v594, 128
  %801 = vxpose.xlu0.b32.cont [6/16] %v599, 128
  %802 = vxpose.xlu0.b32.cont [7/16] %v604, 128
  %803 = vxpose.xlu0.b32.cont [8/16] %v609, 128
  %804 = vxpose.xlu0.b32.cont [9/16] %v614, 128
  %805 = vxpose.xlu0.b32.cont [10/16] %v619, 128
  %806 = vxpose.xlu0.b32.cont [11/16] %v624, 128
  %807 = vxpose.xlu0.b32.cont [12/16] %v629, 128
  %808 = vxpose.xlu0.b32.cont [13/16] %v634, 128
  %809 = vxpose.xlu0.b32.cont [14/16] %v639, 128
  %810 = vxpose.xlu0.b32.cont [15/16] %v644, 128
  %811 = vxpose.xlu0.b32.end [16/16] %v649, 128
  %v812 = vpop.trf.xlu0
  %v813 = vpop.trf.xlu0
  %v814 = vpop.trf.xlu0
  %v815 = vpop.trf.xlu0
  %v816 = vpop.trf.xlu0
  %v817 = vpop.trf.xlu0
  %v818 = vpop.trf.xlu0
  %v819 = vpop.trf.xlu0
  %v820 = vpop.trf.xlu0
  %v821 = vpop.trf.xlu0
  %v822 = vpop.trf.xlu0
  %v823 = vpop.trf.xlu0
  %v824 = vpop.trf.xlu0
  %v825 = vpop.trf.xlu0
  %v826 = vpop.trf.xlu0
  %v827 = vpop.trf.xlu0
  %828 = vxpose.xlu0.b32.start [1/16] %v654, 128
  %829 = vxpose.xlu0.b32.cont [2/16] %v659, 128
  %830 = vxpose.xlu0.b32.cont [3/16] %v664, 128
  %831 = vxpose.xlu0.b32.cont [4/16] %v669, 128
  %832 = vxpose.xlu0.b32.cont [5/16] %v674, 128
  %833 = vxpose.xlu0.b32.cont [6/16] %v679, 128
  %834 = vxpose.xlu0.b32.cont [7/16] %v684, 128
  %835 = vxpose.xlu0.b32.cont [8/16] %v689, 128
  %836 = vxpose.xlu0.b32.cont [9/16] %v694, 128
  %837 = vxpose.xlu0.b32.cont [10/16] %v699, 128
  %838 = vxpose.xlu0.b32.cont [11/16] %v704, 128
  %839 = vxpose.xlu0.b32.cont [12/16] %v709, 128
  %840 = vxpose.xlu0.b32.cont [13/16] %v714, 128
  %841 = vxpose.xlu0.b32.cont [14/16] %v719, 128
  %842 = vxpose.xlu0.b32.cont [15/16] %v724, 128
  %843 = vxpose.xlu0.b32.end [16/16] %v729, 128
  %v844 = vpop.trf.xlu0
  %v845 = vpop.trf.xlu0
  %v846 = vpop.trf.xlu0
  %v847 = vpop.trf.xlu0
  %v848 = vpop.trf.xlu0
  %v849 = vpop.trf.xlu0
  %v850 = vpop.trf.xlu0
  %v851 = vpop.trf.xlu0
  %v852 = vpop.trf.xlu0
  %v853 = vpop.trf.xlu0
  %v854 = vpop.trf.xlu0
  %v855 = vpop.trf.xlu0
  %v856 = vpop.trf.xlu0
  %v857 = vpop.trf.xlu0
  %v858 = vpop.trf.xlu0
  %v859 = vpop.trf.xlu0
  %v860 = vld [vmem:[%s2] sm:$0xff]
  %862 = vset.pattern.permute.xlu0 0
  %863 = vperm.xlu0 %862, %v860
  %v864 = vpop.permute.xlu0 %863
  %v866 = vadd.f32 %v748, %v864
  %v867 = vadd.f32 %v780, %v864
  %v868 = vadd.f32 %v812, %v864
  %v869 = vadd.f32 %v844, %v864
  %v870 = vxor.u32 %v866, 2147483648
  %v871 = vxor.u32 %v867, 2147483648
  %v872 = vxor.u32 %v868, 2147483648
  %v873 = vxor.u32 %v869, 2147483648
  %v874 = vmul.f32 %v870, 1.442695
  %v875 = vpow.pop %v874
  %v876 = vmul.f32 %v871, 1.442695
  %v877 = vpow.pop %v876
  %v878 = vmul.f32 %v872, 1.442695
  %v879 = vpow.pop %v878
  %v880 = vmul.f32 %v873, 1.442695
  %v881 = vpow.pop %v880
  %v882 = vadd.f32 %v875, 1.0
  %v883 = vadd.f32 %v877, 1.0
  %v884 = vadd.f32 %v879, 1.0
  %v885 = vadd.f32 %v881, 1.0
  %v886 = vrcp.pop %v882
  %v887 = vmul.f32 1.0, %v886
  %v888 = vrcp.pop %v883
  %v889 = vmul.f32 1.0, %v888
  %v890 = vrcp.pop %v884
  %v891 = vmul.f32 1.0, %v890
  %v892 = vrcp.pop %v885
  %v893 = vmul.f32 1.0, %v892
  %894 = vst [vmem:[%s3] sm:$0xff] %v887
  %895 = vst [vmem:[%s3 + $0x8] sm:$0xff] %v889
  %896 = vst [vmem:[%s3 + $0x10] sm:$0xff] %v891
  %897 = vst [vmem:[%s3 + $0x18] sm:$0xff] %v893
  // Predicated region
  $region14: #{stop_conv_forward.1} parent=0 // pred_check
    _
  $region15: #{stop_conv_forward.1} parent=0 // pred_check_branch
    %899 = sbr.rel (0) target = $region17
  $region16: #{stop_conv_forward.1} parent=0 // pred_region
    _
  $region17: #{stop_conv_forward.1} parent=0 // pred_fallthru
    _
  // Predicated region
  $region18: #{stop_conv_forward.1} parent=0 // pred_check
    _
  $region19: #{stop_conv_forward.1} parent=0 // pred_check_branch
    %901 = sbr.rel (0) target = $region21
  $region20: #{stop_conv_forward.1} parent=0 // pred_region
    _
  $region21: #{stop_conv_forward.1} parent=0 // pred_fallthru
    _

</llo_original>
